<compile_context>
chip_gen: v7x
topology: tpu7x:2x2x1
jax: 0.10.0
libtpu: 0.0.40
codegen_flags: <defaults>
</compile_context>

<pallas_src>
import functools

import jax
import jax.numpy as jnp
from jax.experimental import pallas as pl
from jax.experimental.pallas import tpu as pltpu

INPUT_SIZE = 10
HIDDEN_SIZE = 30
OUTPUT_SIZE = 2

SUBLANE = 8  # vreg sublane width (second-to-last dim)


def _round_up(n, m):
    return ((n + m - 1) // m) * m


def _cdiv(a, b):
    return -(-a // b)


def mlp_kernel(x_ref, w1_ref, b1_ref, w2_ref, b2_ref, w3_ref, b3_ref, o_ref):
    # Layer a + ReLU (b)
    h = jnp.dot(x_ref[...], w1_ref[...], preferred_element_type=jnp.float32) + b1_ref[...]
    h = jnp.maximum(h, 0.0)
    # Layer c + ReLU (d)
    h = jnp.dot(h, w2_ref[...], preferred_element_type=jnp.float32) + b2_ref[...]
    h = jnp.maximum(h, 0.0)
    # Layer e (no activation)
    o_ref[...] = (jnp.dot(h, w3_ref[...], preferred_element_type=jnp.float32)
                  + b3_ref[...]).astype(o_ref.dtype)


def _choose_tiling(batch, tile_b_max):
    """Pick (tile_b, padded_batch) so the remainder tile is small and, for large
    batches, there are >= 2 grid steps (v7x 2-TC megacore sharding)."""
    num_tiles = max(1, _cdiv(batch, tile_b_max))
    if num_tiles == 1 and batch >= 2 * SUBLANE:
        num_tiles = 2
    tile_b = _round_up(_cdiv(batch, num_tiles), SUBLANE)
    padded_batch = tile_b * num_tiles
    return tile_b, padded_batch


@functools.partial(jax.jit, static_argnames=("tile_b_max",))
def simple_fc_forward(x, w1, b1, w2, b2, w3, b3, *, tile_b_max=2048):
    """x: (batch, INPUT_SIZE) f32. w*: (in, out). b*: (1, out) or (out,)."""
    batch = x.shape[0]
    tile_b, padded_batch = _choose_tiling(batch, tile_b_max)

    xp = x.astype(jnp.float32)
    if padded_batch != batch:
        # Zero-pad remainder rows only; they are sliced off after the call.
        xp = jnp.pad(xp, ((0, padded_batch - batch), (0, 0)))

    w1f = w1.astype(jnp.float32)
    b1f = jnp.reshape(b1, (1, -1)).astype(jnp.float32)
    w2f = w2.astype(jnp.float32)
    b2f = jnp.reshape(b2, (1, -1)).astype(jnp.float32)
    w3f = w3.astype(jnp.float32)
    b3f = jnp.reshape(b3, (1, -1)).astype(jnp.float32)

    grid = (padded_batch // tile_b,)

    # Weights/biases: constant block index -> resident in VMEM across all batch tiles
    # (no re-DMA per step).  Block shapes equal the full (tiny) array shapes.
    def const(shape):
        return pl.BlockSpec(shape, lambda i: (0, 0))

    out = pl.pallas_call(
        mlp_kernel,
        out_shape=jax.ShapeDtypeStruct((padded_batch, OUTPUT_SIZE), jnp.float32),
        grid=grid,
        in_specs=[
            pl.BlockSpec((tile_b, INPUT_SIZE), lambda i: (i, 0)),   # true-width input
            const((INPUT_SIZE, HIDDEN_SIZE)), const((1, HIDDEN_SIZE)),
            const((HIDDEN_SIZE, HIDDEN_SIZE)), const((1, HIDDEN_SIZE)),
            const((HIDDEN_SIZE, OUTPUT_SIZE)), const((1, OUTPUT_SIZE)),
        ],
        out_specs=pl.BlockSpec((tile_b, OUTPUT_SIZE), lambda i: (i, 0)),  # true-width output
        compiler_params=pltpu.CompilerParams(
            dimension_semantics=("parallel",),  # megacore / v7x 2-TC batch sharding
        ),
    )(xp, w1f, b1f, w2f, b2f, w3f, b3f)

    if padded_batch != batch:
        out = out[:batch]
    return out


def init_linear(key, fan_in, fan_out):
    # Deterministic init mimicking PyTorch nn.Linear default: U(-1/sqrt(fan_in), +1/sqrt(fan_in))
    kw, kb = jax.random.split(key)
    bound = 1.0 / jnp.sqrt(float(fan_in))
    w = jax.random.uniform(kw, (fan_in, fan_out), jnp.float32, -bound, bound)
    b = jax.random.uniform(kb, (1, fan_out), jnp.float32, -bound, bound)
    return w, b


def _reference(x, w1, b1, w2, b2, w3, b3):
    h = jnp.maximum(x @ w1 + b1, 0.0)
    h = jnp.maximum(h @ w2 + b2, 0.0)
    return h @ w3 + b3


if __name__ == "__main__":
    key = jax.random.PRNGKey(0)
    kx, k1, k2, k3 = jax.random.split(key, 4)

    w1, b1 = init_linear(k1, INPUT_SIZE, HIDDEN_SIZE)
    w2, b2 = init_linear(k2, HIDDEN_SIZE, HIDDEN_SIZE)
    w3, b3 = init_linear(k3, HIDDEN_SIZE, OUTPUT_SIZE)

    # Small example matching the module's input spec: (batch, input_size).
    batch = 8
    x = jax.random.normal(kx, (batch, INPUT_SIZE), jnp.float32)

    out = simple_fc_forward(x, w1, b1, w2, b2, w3, b3)
    out = jax.block_until_ready(out)

    ref = _reference(x, w1, b1, w2, b2, w3, b3)
    assert out.shape == (batch, OUTPUT_SIZE)
    assert jnp.allclose(out, ref, atol=1e-5, rtol=1e-5)

    # Second check: multi-tile grid with a batch that is not a tile multiple
    # (20 rows, tile cap 8 -> grid of 3 with a zero-padded 4-row remainder).
    x2 = jax.random.normal(jax.random.PRNGKey(1), (20, INPUT_SIZE), jnp.float32)
    out2 = jax.block_until_ready(
        simple_fc_forward(x2, w1, b1, w2, b2, w3, b3, tile_b_max=8))
    ref2 = _reference(x2, w1, b1, w2, b2, w3, b3)
    assert out2.shape == (20, OUTPUT_SIZE)
    assert jnp.allclose(out2, ref2, atol=1e-5, rtol=1e-5)

    # Third check: batch large enough to trigger the >=2-tile (v7x) path,
    # non-multiple of 8 batch (600 -> 2 tiles of 304, 8 padded rows).
    x3 = jax.random.normal(jax.random.PRNGKey(2), (600, INPUT_SIZE), jnp.float32)
    out3 = jax.block_until_ready(simple_fc_forward(x3, w1, b1, w2, b2, w3, b3))
    ref3 = _reference(x3, w1, b1, w2, b2, w3, b3)
    assert out3.shape == (600, OUTPUT_SIZE)
    assert jnp.allclose(out3, ref3, atol=1e-5, rtol=1e-5)

    print("KERNEL_OK")
</pallas_src>

<mosaic_0001>
module attributes {stable_mosaic.version = 11 : i64} {
  func.func @mlp_kernel(%arg0: i32, %arg1: memref<8x10xf32, #tpu.memory_space<vmem>>, %arg2: memref<10x30xf32, #tpu.memory_space<vmem>>, %arg3: memref<1x30xf32, #tpu.memory_space<vmem>>, %arg4: memref<30x30xf32, #tpu.memory_space<vmem>>, %arg5: memref<1x30xf32, #tpu.memory_space<vmem>>, %arg6: memref<30x2xf32, #tpu.memory_space<vmem>>, %arg7: memref<1x2xf32, #tpu.memory_space<vmem>>, %arg8: memref<8x2xf32, #tpu.memory_space<vmem>>) attributes {dimension_semantics = [#tpu.dimension_semantics<parallel>], iteration_bounds = array<i64: 1>, scalar_prefetch = 0 : i64, scratch_operands = 0 : i64, tpu.core_type = #tpu.core_type<tc>, window_params = [{transform_indices = @transform_0, window_bounds = array<i64: 8, 10>}, {pipeline_mode = #tpu.pipeline_mode<synchronous>, transform_indices = @transform_1, window_bounds = array<i64: 10, 30>}, {pipeline_mode = #tpu.pipeline_mode<synchronous>, transform_indices = @transform_2, window_bounds = array<i64: 1, 30>}, {pipeline_mode = #tpu.pipeline_mode<synchronous>, transform_indices = @transform_3, window_bounds = array<i64: 30, 30>}, {pipeline_mode = #tpu.pipeline_mode<synchronous>, transform_indices = @transform_4, window_bounds = array<i64: 1, 30>}, {pipeline_mode = #tpu.pipeline_mode<synchronous>, transform_indices = @transform_5, window_bounds = array<i64: 30, 2>}, {pipeline_mode = #tpu.pipeline_mode<synchronous>, transform_indices = @transform_6, window_bounds = array<i64: 1, 2>}, {transform_indices = @transform_7, window_bounds = array<i64: 8, 2>}]} {
    %c0 = arith.constant 0 : index
    %c0_0 = arith.constant 0 : index
    %0 = vector.load %arg1[%c0, %c0_0] : memref<8x10xf32, #tpu.memory_space<vmem>>, vector<8x10xf32>
    %c0_1 = arith.constant 0 : index
    %c0_2 = arith.constant 0 : index
    %1 = vector.load %arg2[%c0_1, %c0_2] : memref<10x30xf32, #tpu.memory_space<vmem>>, vector<10x30xf32>
    %cst = arith.constant dense<0.000000e+00> : vector<8x30xf32>
    %2 = tpu.matmul %0, %1, %cst {dimension_numbers = #tpu.dot_dimension_numbers<[1], [0], [0], [1], [0, 0, 1, 1], [], []>} : vector<8x10xf32>, vector<10x30xf32>, vector<8x30xf32> -> vector<8x30xf32>
    %c0_3 = arith.constant 0 : index
    %c0_4 = arith.constant 0 : index
    %3 = vector.load %arg3[%c0_3, %c0_4] : memref<1x30xf32, #tpu.memory_space<vmem>>, vector<1x30xf32>
    %4 = vector.broadcast %3 : vector<1x30xf32> to vector<8x30xf32>
    %5 = arith.addf %2, %4 : vector<8x30xf32>
    %cst_5 = arith.constant 0.000000e+00 : f32
    %6 = vector.broadcast %cst_5 : f32 to vector<8x30xf32>
    %7 = arith.maximumf %5, %6 : vector<8x30xf32>
    %c0_6 = arith.constant 0 : index
    %c0_7 = arith.constant 0 : index
    %8 = vector.load %arg4[%c0_6, %c0_7] : memref<30x30xf32, #tpu.memory_space<vmem>>, vector<30x30xf32>
    %cst_8 = arith.constant dense<0.000000e+00> : vector<8x30xf32>
    %9 = tpu.matmul %7, %8, %cst_8 {dimension_numbers = #tpu.dot_dimension_numbers<[1], [0], [0], [1], [0, 0, 1, 1], [], []>} : vector<8x30xf32>, vector<30x30xf32>, vector<8x30xf32> -> vector<8x30xf32>
    %c0_9 = arith.constant 0 : index
    %c0_10 = arith.constant 0 : index
    %10 = vector.load %arg5[%c0_9, %c0_10] : memref<1x30xf32, #tpu.memory_space<vmem>>, vector<1x30xf32>
    %11 = vector.broadcast %10 : vector<1x30xf32> to vector<8x30xf32>
    %12 = arith.addf %9, %11 : vector<8x30xf32>
    %cst_11 = arith.constant 0.000000e+00 : f32
    %13 = vector.broadcast %cst_11 : f32 to vector<8x30xf32>
    %14 = arith.maximumf %12, %13 : vector<8x30xf32>
    %c0_12 = arith.constant 0 : index
    %c0_13 = arith.constant 0 : index
    %15 = vector.load %arg6[%c0_12, %c0_13] : memref<30x2xf32, #tpu.memory_space<vmem>>, vector<30x2xf32>
    %cst_14 = arith.constant dense<0.000000e+00> : vector<8x2xf32>
    %16 = tpu.matmul %14, %15, %cst_14 {dimension_numbers = #tpu.dot_dimension_numbers<[1], [0], [0], [1], [0, 0, 1, 1], [], []>} : vector<8x30xf32>, vector<30x2xf32>, vector<8x2xf32> -> vector<8x2xf32>
    %c0_15 = arith.constant 0 : index
    %c0_16 = arith.constant 0 : index
    %17 = vector.load %arg7[%c0_15, %c0_16] : memref<1x2xf32, #tpu.memory_space<vmem>>, vector<1x2xf32>
    %18 = vector.broadcast %17 : vector<1x2xf32> to vector<8x2xf32>
    %19 = arith.addf %16, %18 : vector<8x2xf32>
    %c0_17 = arith.constant 0 : index
    %c0_18 = arith.constant 0 : index
    %20 = vector.load %arg8[%c0_17, %c0_18] : memref<8x2xf32, #tpu.memory_space<vmem>>, vector<8x2xf32>
    tpu.vector_store %arg8[%c0_17, %c0_18], %19 {strides = array<i32>} : memref<8x2xf32, #tpu.memory_space<vmem>>, vector<8x2xf32>,
    return
  }
  func.func @transform_0(%arg0: i32) -> (i32, i32) {
    %c0_i32 = arith.constant 0 : i32
    %c0_i32_0 = arith.constant 0 : i32
    return %arg0, %c0_i32 : i32, i32
  }
  func.func @transform_1(%arg0: i32) -> (i32, i32) {
    %c0_i32 = arith.constant 0 : i32
    %c0_i32_0 = arith.constant 0 : i32
    %c0_i32_1 = arith.constant 0 : i32
    return %c0_i32, %c0_i32_0 : i32, i32
  }
  func.func @transform_2(%arg0: i32) -> (i32, i32) {
    %c0_i32 = arith.constant 0 : i32
    %c0_i32_0 = arith.constant 0 : i32
    %c0_i32_1 = arith.constant 0 : i32
    return %c0_i32, %c0_i32_0 : i32, i32
  }
  func.func @transform_3(%arg0: i32) -> (i32, i32) {
    %c0_i32 = arith.constant 0 : i32
    %c0_i32_0 = arith.constant 0 : i32
    %c0_i32_1 = arith.constant 0 : i32
    return %c0_i32, %c0_i32_0 : i32, i32
  }
  func.func @transform_4(%arg0: i32) -> (i32, i32) {
    %c0_i32 = arith.constant 0 : i32
    %c0_i32_0 = arith.constant 0 : i32
    %c0_i32_1 = arith.constant 0 : i32
    return %c0_i32, %c0_i32_0 : i32, i32
  }
  func.func @transform_5(%arg0: i32) -> (i32, i32) {
    %c0_i32 = arith.constant 0 : i32
    %c0_i32_0 = arith.constant 0 : i32
    %c0_i32_1 = arith.constant 0 : i32
    return %c0_i32, %c0_i32_0 : i32, i32
  }
  func.func @transform_6(%arg0: i32) -> (i32, i32) {
    %c0_i32 = arith.constant 0 : i32
    %c0_i32_0 = arith.constant 0 : i32
    %c0_i32_1 = arith.constant 0 : i32
    return %c0_i32, %c0_i32_0 : i32, i32
  }
  func.func @transform_7(%arg0: i32) -> (i32, i32) {
    %c0_i32 = arith.constant 0 : i32
    %c0_i32_0 = arith.constant 0 : i32
    return %arg0, %c0_i32 : i32, i32
  }
}

</mosaic_0001>

<llo_original>
// kernel: simple_fc_forward.1
$region0: #{simple_fc_forward.1}
  #allocation0 [shape = 'u32[]', space=smem, size = 0x4, offset = 0x4, fixed_abs, tag = 'smem constant byte address 0x4 - core index']
  #allocation1 [shape = 'u32[144,128]{1,0:T(1,128)}', space=vmem, size = 0x12000, scoped, tag = 'internal scratch']
  %s0 = inlined_call_operand.vmem [shape: f32[8,10], index: 0, kind: input, shape index: {}]
  %s1 = inlined_call_operand.hbm [shape: f32[10,30], index: 1, kind: input, shape index: {}]
  %s2 = inlined_call_operand.vmem [shape: f32[1,30], index: 2, kind: input, shape index: {}]
  %s3 = inlined_call_operand.vmem [shape: f32[30,30], index: 3, kind: input, shape index: {}]
  %s4 = inlined_call_operand.vmem [shape: f32[1,30], index: 4, kind: input, shape index: {}]
  %s5 = inlined_call_operand.vmem [shape: f32[30,2], index: 5, kind: input, shape index: {}]
  %s6 = inlined_call_operand.vmem [shape: f32[1,2], index: 6, kind: input, shape index: {}]
  %s7 = inlined_call_operand.vmem [shape: f32[8,2], index: 7, kind: output, shape index: {}]
  %s8 = sld [smem:[#allocation0]]
  $region42: #{simple_fc_forward.1} parent=0
    _
  %s10 = ssub.s32 1, %s8
  %s11 = scalar_select 0, %s10, %s8
  $region1: #{simple_fc_forward.1} parent=0
    #allocation2 [shape = 'u8[8192]{0}', space=vmem, size = 0x2000, scoped, tag = 'input window, operand 1, single buffered']
    #allocation3 [shape = 's32[1]{0}', space=sflag, size = 0x4, scoped, tag = 'scoped memory for simple_fc_forward.1']
    %12 = vsyncpa [#allocation3], 0
    // Predicated region
    $region2: #{simple_fc_forward.1} parent=1 // pred_check
      _
    $region3: #{simple_fc_forward.1} parent=1 // pred_check_branch
      %14 = sbr.rel (0) target = $region5
    $region4: #{simple_fc_forward.1} parent=1 // pred_region
      _
    $region5: #{simple_fc_forward.1} parent=1 // pred_fallthru
      _
    // Predicated region
    $region6: #{simple_fc_forward.1} parent=1 // pred_check
      _
    $region7: #{simple_fc_forward.1} parent=1 // pred_check_branch
      %16 = sbr.rel (0) target = $region9
    $region8: #{simple_fc_forward.1} parent=1 // pred_region
      %s18 = ssub.s32 256, 256
      %19 = vsyncadd [#allocation3], %s18
      %s20 = sshll.u32 [#allocation2], 4
      %s21 = int_to_ptr.vmem [resolvable:$true] %s20
      %26 = dma.hbm_to_vmem [thread:$0]  %s1, 256, %s21, [#allocation3], 128, 128, 8
    $region9: #{simple_fc_forward.1} parent=1 // pred_fallthru
      _
    // Predicated region
    $region10: #{simple_fc_forward.1} parent=1 // pred_check
      _
    $region11: #{simple_fc_forward.1} parent=1 // pred_check_branch
      %28 = sbr.rel (0) target = $region13
    $region12: #{simple_fc_forward.1} parent=1 // pred_region
      _
    $region13: #{simple_fc_forward.1} parent=1 // pred_fallthru
      _
    // Predicated region
    $region14: #{simple_fc_forward.1} parent=1 // pred_check
      _
    $region15: #{simple_fc_forward.1} parent=1 // pred_check_branch
      %30 = sbr.rel (0) target = $region17
    $region16: #{simple_fc_forward.1} parent=1 // pred_region
      _
    $region17: #{simple_fc_forward.1} parent=1 // pred_fallthru
      _
    // Predicated region
    $region18: #{simple_fc_forward.1} parent=1 // pred_check
      _
    $region19: #{simple_fc_forward.1} parent=1 // pred_check_branch
      %32 = sbr.rel (0) target = $region21
    $region20: #{simple_fc_forward.1} parent=1 // pred_region
      _
    $region21: #{simple_fc_forward.1} parent=1 // pred_fallthru
      _
    // Predicated region
    $region22: #{simple_fc_forward.1} parent=1 // pred_check
      _
    $region23: #{simple_fc_forward.1} parent=1 // pred_check_branch
      %34 = sbr.rel (0) target = $region25
    $region24: #{simple_fc_forward.1} parent=1 // pred_region
      _
    $region25: #{simple_fc_forward.1} parent=1 // pred_fallthru
      _
    // Predicated region
    $region26: #{simple_fc_forward.1} parent=1 // pred_check
      _
    $region27: #{simple_fc_forward.1} parent=1 // pred_check_branch
      %36 = sbr.rel (0) target = $region29
    $region28: #{simple_fc_forward.1} parent=1 // pred_region
      _
    $region29: #{simple_fc_forward.1} parent=1 // pred_fallthru
      _
    // Predicated region
    $region30: #{simple_fc_forward.1} parent=1 // pred_check
      _
    $region31: #{simple_fc_forward.1} parent=1 // pred_check_branch
      %38 = sbr.rel (0) target = $region33
    $region32: #{simple_fc_forward.1} parent=1 // pred_region
      %39 = dma.done [#allocation3], 256
    $region33: #{simple_fc_forward.1} parent=1 // pred_fallthru
      _
    %v40 = vld [vmem:[%s0] sm:$0xff]
    %v41 = vld [vmem:[#allocation2] sm:$0xff]
    %v42 = vld [vmem:[#allocation2 + $0x8] sm:$0x3]
    %v43 = vld [vmem:[%s2] sm:$0x1]
    %v45 = vlaneseq
    %v46 = vshrl.u32 %v45, 7
    %v47 = vsub.s32 0, %v46
    %v48 = vrot.slane %v43, %v47
    %vm50 = vcmask 80896
    %v52 = vsel %vm50, %v40, 0
    %vm54 = vcmask 1041408
    %v56 = vsel %vm54, %v42, 0
    %58 = vmatprep.subr.mxu0 0.0
    %59 = vmatpush1.msra.mxu0 %v41
    %60 = vmatprep.subr.mxu0 0.0
    %61 = vmatpush1.msra.mxu0 %v56
    %62 = vmatprep.subr.mxu0 0.0
    %63 = vmatpush1.msra.mxu0 0.0
    %64 = vmatprep.subr.mxu0 0.0
    %65 = vmatpush1.msra.mxu0 0.0
    %66 = vmatprep.subr.mxu0 0.0
    %67 = vmatpush1.msra.mxu0 0.0
    %68 = vmatprep.subr.mxu0 0.0
    %69 = vmatpush1.msra.mxu0 0.0
    %70 = vmatprep.subr.mxu0 0.0
    %71 = vmatpush1.msra.mxu0 0.0
    %72 = vmatprep.subr.mxu0 0.0
    %73 = vmatpush1.msra.mxu0 0.0
    %74 = vmatprep.subr.mxu0 0.0
    %75 = vmatpush1.msra.mxu0 0.0
    %76 = vmatprep.subr.mxu0 0.0
    %77 = vmatpush1.msra.mxu0 0.0
    %78 = vmatprep.subr.mxu0 0.0
    %79 = vmatpush1.msra.mxu0 0.0
    %80 = vmatprep.subr.mxu0 0.0
    %81 = vmatpush1.msra.mxu0 0.0
    %82 = vmatprep.subr.mxu0 0.0
    %83 = vmatpush1.msra.mxu0 0.0
    %84 = vmatprep.subr.mxu0 0.0
    %85 = vmatpush1.msra.mxu0 0.0
    %86 = vmatprep.subr.mxu0 0.0
    %87 = vmatpush1.msra.mxu0 0.0
    %88 = vmatprep.subr.mxu0 0.0
    %89 = vmatpush1.msra.mxu0 0.0
    %90 = vmatprep.subr.mxu0 0.0
    %91 = vmatpush1.msra.mxu0 0.0
    %92 = vmatprep.subr.mxu0 0.0
    %93 = vmatpush1.msra.mxu0 0.0
    %94 = vmatprep.subr.mxu0 0.0
    %95 = vmatpush1.msra.mxu0 0.0
    %96 = vmatprep.subr.mxu0 0.0
    %97 = vmatpush1.msra.mxu0 0.0
    %98 = vmatprep.subr.mxu0 0.0
    %99 = vmatpush1.msra.mxu0 0.0
    %100 = vmatprep.subr.mxu0 0.0
    %101 = vmatpush1.msra.mxu0 0.0
    %102 = vmatprep.subr.mxu0 0.0
    %103 = vmatpush1.msra.mxu0 0.0
    %104 = vmatprep.subr.mxu0 0.0
    %105 = vmatpush1.msra.mxu0 0.0
    %106 = vmatprep.subr.mxu0 0.0
    %107 = vmatpush1.msra.mxu0 0.0
    %108 = vmatprep.subr.mxu0 0.0
    %109 = vmatpush1.msra.mxu0 0.0
    %110 = vmatprep.subr.mxu0 0.0
    %111 = vmatpush1.msra.mxu0 0.0
    %112 = vmatprep.subr.mxu0 0.0
    %113 = vmatpush1.msra.mxu0 0.0
    %114 = vmatprep.subr.mxu0 0.0
    %115 = vmatpush1.msra.mxu0 0.0
    %116 = vmatprep.subr.mxu0 0.0
    %117 = vmatpush1.msra.mxu0 0.0
    %118 = vmatprep.subr.mxu0 0.0
    %119 = vmatpush1.msra.mxu0 0.0
    %120 = vmatprep.subr.mxu0 0.0
    %121 = vmatpush1.msra.mxu0 0.0
    %122 = vmatprep.mubr.f32.mxu0 0.0
    %123 = vmatmul.mubr.f32.gmra.mrb[0].mxu0 %v52
    %v124 = vpop.f32.mrb[0].mxu0
    %v125 = vadd.f32 %v48, %v124
    %v126 = vpop.f32.mrb[0].mxu0
    %127 = vdwg.mxu0
    %v128 = vmax.f32 %v125, 0.0
    %v129 = vld [vmem:[%s3] sm:$0xff]
    %v130 = vld [vmem:[%s3 + $0x8] sm:$0xff]
    %v131 = vld [vmem:[%s3 + $0x10] sm:$0xff]
    %v132 = vld [vmem:[%s3 + $0x18] sm:$0x3f]
    %v133 = vld [vmem:[%s4] sm:$0x1]
    %v135 = vlaneseq
    %v136 = vshrl.u32 %v135, 7
    %v137 = vsub.s32 0, %v136
    %v138 = vrot.slane %v133, %v137
    %vm140 = vcmask 244736
    %v142 = vsel %vm140, %v128, 0
    %vm144 = vcmask 1045504
    %v146 = vsel %vm144, %v132, 0
    %148 = vmatprep.subr.mxu0 0.0
    %149 = vmatpush1.msra.mxu0 %v129
    %150 = vmatprep.subr.mxu0 0.0
    %151 = vmatpush1.msra.mxu0 %v130
    %152 = vmatprep.subr.mxu0 0.0
    %153 = vmatpush1.msra.mxu0 %v131
    %154 = vmatprep.subr.mxu0 0.0
    %155 = vmatpush1.msra.mxu0 %v146
    %156 = vmatprep.subr.mxu0 0.0
    %157 = vmatpush1.msra.mxu0 0.0
    %158 = vmatprep.subr.mxu0 0.0
    %159 = vmatpush1.msra.mxu0 0.0
    %160 = vmatprep.subr.mxu0 0.0
    %161 = vmatpush1.msra.mxu0 0.0
    %162 = vmatprep.subr.mxu0 0.0
    %163 = vmatpush1.msra.mxu0 0.0
    %164 = vmatprep.subr.mxu0 0.0
    %165 = vmatpush1.msra.mxu0 0.0
    %166 = vmatprep.subr.mxu0 0.0
    %167 = vmatpush1.msra.mxu0 0.0
    %168 = vmatprep.subr.mxu0 0.0
    %169 = vmatpush1.msra.mxu0 0.0
    %170 = vmatprep.subr.mxu0 0.0
    %171 = vmatpush1.msra.mxu0 0.0
    %172 = vmatprep.subr.mxu0 0.0
    %173 = vmatpush1.msra.mxu0 0.0
    %174 = vmatprep.subr.mxu0 0.0
    %175 = vmatpush1.msra.mxu0 0.0
    %176 = vmatprep.subr.mxu0 0.0
    %177 = vmatpush1.msra.mxu0 0.0
    %178 = vmatprep.subr.mxu0 0.0
    %179 = vmatpush1.msra.mxu0 0.0
    %180 = vmatprep.subr.mxu0 0.0
    %181 = vmatpush1.msra.mxu0 0.0
    %182 = vmatprep.subr.mxu0 0.0
    %183 = vmatpush1.msra.mxu0 0.0
    %184 = vmatprep.subr.mxu0 0.0
    %185 = vmatpush1.msra.mxu0 0.0
    %186 = vmatprep.subr.mxu0 0.0
    %187 = vmatpush1.msra.mxu0 0.0
    %188 = vmatprep.subr.mxu0 0.0
    %189 = vmatpush1.msra.mxu0 0.0
    %190 = vmatprep.subr.mxu0 0.0
    %191 = vmatpush1.msra.mxu0 0.0
    %192 = vmatprep.subr.mxu0 0.0
    %193 = vmatpush1.msra.mxu0 0.0
    %194 = vmatprep.subr.mxu0 0.0
    %195 = vmatpush1.msra.mxu0 0.0
    %196 = vmatprep.subr.mxu0 0.0
    %197 = vmatpush1.msra.mxu0 0.0
    %198 = vmatprep.subr.mxu0 0.0
    %199 = vmatpush1.msra.mxu0 0.0
    %200 = vmatprep.subr.mxu0 0.0
    %201 = vmatpush1.msra.mxu0 0.0
    %202 = vmatprep.subr.mxu0 0.0
    %203 = vmatpush1.msra.mxu0 0.0
    %204 = vmatprep.subr.mxu0 0.0
    %205 = vmatpush1.msra.mxu0 0.0
    %206 = vmatprep.subr.mxu0 0.0
    %207 = vmatpush1.msra.mxu0 0.0
    %208 = vmatprep.subr.mxu0 0.0
    %209 = vmatpush1.msra.mxu0 0.0
    %210 = vmatprep.subr.mxu0 0.0
    %211 = vmatpush1.msra.mxu0 0.0
    %212 = vmatprep.mubr.f32.mxu0 0.0
    %213 = vmatmul.mubr.f32.gmra.mrb[0].mxu0 %v142
    %v214 = vpop.f32.mrb[0].mxu0
    %v215 = vadd.f32 %v138, %v214
    %v216 = vpop.f32.mrb[0].mxu0
    %217 = vdwg.mxu0
    %v218 = vmax.f32 %v215, 0.0
    %v219 = vld [vmem:[%s5] sm:$0xff]
    %v220 = vld [vmem:[%s5 + $0x8] sm:$0xff]
    %v221 = vld [vmem:[%s5 + $0x10] sm:$0xff]
    %v222 = vld [vmem:[%s5 + $0x18] sm:$0x3f]
    %v223 = vld [vmem:[%s6] sm:$0x1]
    %v225 = vlaneseq
    %v226 = vshrl.u32 %v225, 7
    %v227 = vsub.s32 0, %v226
    %v228 = vrot.slane %v223, %v227
    %v231 = vsel %vm140, %v218, 0
    %v234 = vsel %vm144, %v222, 0
    %236 = vmatprep.subr.mxu0 0.0
    %237 = vmatpush1.msra.mxu0 %v219
    %238 = vmatprep.subr.mxu0 0.0
    %239 = vmatpush1.msra.mxu0 %v220
    %240 = vmatprep.subr.mxu0 0.0
    %241 = vmatpush1.msra.mxu0 %v221
    %242 = vmatprep.subr.mxu0 0.0
    %243 = vmatpush1.msra.mxu0 %v234
    %244 = vmatprep.subr.mxu0 0.0
    %245 = vmatpush1.msra.mxu0 0.0
    %246 = vmatprep.subr.mxu0 0.0
    %247 = vmatpush1.msra.mxu0 0.0
    %248 = vmatprep.subr.mxu0 0.0
    %249 = vmatpush1.msra.mxu0 0.0
    %250 = vmatprep.subr.mxu0 0.0
    %251 = vmatpush1.msra.mxu0 0.0
    %252 = vmatprep.subr.mxu0 0.0
    %253 = vmatpush1.msra.mxu0 0.0
    %254 = vmatprep.subr.mxu0 0.0
    %255 = vmatpush1.msra.mxu0 0.0
    %256 = vmatprep.subr.mxu0 0.0
    %257 = vmatpush1.msra.mxu0 0.0
    %258 = vmatprep.subr.mxu0 0.0
    %259 = vmatpush1.msra.mxu0 0.0
    %260 = vmatprep.subr.mxu0 0.0
    %261 = vmatpush1.msra.mxu0 0.0
    %262 = vmatprep.subr.mxu0 0.0
    %263 = vmatpush1.msra.mxu0 0.0
    %264 = vmatprep.subr.mxu0 0.0
    %265 = vmatpush1.msra.mxu0 0.0
    %266 = vmatprep.subr.mxu0 0.0
    %267 = vmatpush1.msra.mxu0 0.0
    %268 = vmatprep.subr.mxu0 0.0
    %269 = vmatpush1.msra.mxu0 0.0
    %270 = vmatprep.subr.mxu0 0.0
    %271 = vmatpush1.msra.mxu0 0.0
    %272 = vmatprep.subr.mxu0 0.0
    %273 = vmatpush1.msra.mxu0 0.0
    %274 = vmatprep.subr.mxu0 0.0
    %275 = vmatpush1.msra.mxu0 0.0
    %276 = vmatprep.subr.mxu0 0.0
    %277 = vmatpush1.msra.mxu0 0.0
    %278 = vmatprep.subr.mxu0 0.0
    %279 = vmatpush1.msra.mxu0 0.0
    %280 = vmatprep.subr.mxu0 0.0
    %281 = vmatpush1.msra.mxu0 0.0
    %282 = vmatprep.subr.mxu0 0.0
    %283 = vmatpush1.msra.mxu0 0.0
    %284 = vmatprep.subr.mxu0 0.0
    %285 = vmatpush1.msra.mxu0 0.0
    %286 = vmatprep.subr.mxu0 0.0
    %287 = vmatpush1.msra.mxu0 0.0
    %288 = vmatprep.subr.mxu0 0.0
    %289 = vmatpush1.msra.mxu0 0.0
    %290 = vmatprep.subr.mxu0 0.0
    %291 = vmatpush1.msra.mxu0 0.0
    %292 = vmatprep.subr.mxu0 0.0
    %293 = vmatpush1.msra.mxu0 0.0
    %294 = vmatprep.subr.mxu0 0.0
    %295 = vmatpush1.msra.mxu0 0.0
    %296 = vmatprep.subr.mxu0 0.0
    %297 = vmatpush1.msra.mxu0 0.0
    %298 = vmatprep.subr.mxu0 0.0
    %299 = vmatpush1.msra.mxu0 0.0
    %300 = vmatprep.mubr.f32.mxu0 0.0
    %301 = vmatmul.mubr.f32.gmra.mrb[0].mxu0 %v231
    %v302 = vpop.f32.mrb[0].mxu0
    %v303 = vadd.f32 %v228, %v302
    %v304 = vpop.f32.mrb[0].mxu0
    %305 = vdwg.mxu0
    %vm306 = vcmask 15360
    %307 = vst.msk [vmem:[%s7] sm:$0xff] %vm306, %v303
    // Predicated region
    $region34: #{simple_fc_forward.1} parent=1 // pred_check
      _
    $region35: #{simple_fc_forward.1} parent=1 // pred_check_branch
      %309 = sbr.rel (0) target = $region37
    $region36: #{simple_fc_forward.1} parent=1 // pred_region
      _
    $region37: #{simple_fc_forward.1} parent=1 // pred_fallthru
      _
    // Predicated region
    $region38: #{simple_fc_forward.1} parent=1 // pred_check
      _
    $region39: #{simple_fc_forward.1} parent=1 // pred_check_branch
      %311 = sbr.rel (0) target = $region41
    $region40: #{simple_fc_forward.1} parent=1 // pred_region
      _
    $region41: #{simple_fc_forward.1} parent=1 // pred_fallthru
      _
    %312 = vsyncpa [#allocation3], 1

</llo_original>
